<compile_context>
chip_gen: v5e
topology: v5e:2x2
jax: 0.10.0
libtpu: 0.0.40
codegen_flags: <defaults>
</compile_context>

<pallas_src>
import jax
import jax.numpy as jnp
from jax import lax
from jax.experimental import pallas as pl
from jax.experimental.pallas import tpu as pltpu


def _round_up(x, m):
    return ((x + m - 1) // m) * m


def _vmem_cap_bytes():
    """Generation-aware physical VMEM capacity (fallback: v7x's 64 MiB)."""
    try:
        info = pltpu.get_tpu_info()
        cap = getattr(info, "vmem_capacity_bytes", None)
        if cap:
            return int(cap)
    except Exception:
        pass
    return 64 << 20


def _make_lstm_kernel(seq_len, chunk, hidden, mask_tail):
    """Per-chunk LSTM recurrence kernel factory (closes over static sizes)."""
    H, TT = hidden, chunk

    def kernel(xg_ref, whh_ref, h_out_ref, hn_ref, cn_ref):
        c_idx = pl.program_id(1)          # time-chunk index (inner, "arbitrary")

        # hn/cn blocks are revisited across the time axis -> VMEM-resident
        # recurrent state per batch tile.  Initialize once per batch tile.
        @pl.when(c_idx == 0)
        def _():
            hn_ref[...] = jnp.zeros_like(hn_ref)
            cn_ref[...] = jnp.zeros_like(cn_ref)

        whh = whh_ref[...]                        # (H, 4H) bf16, g cols pre-scaled by 2
        h = hn_ref[...].astype(whh.dtype)         # (TB, H) bf16 carried hidden state
        c = cn_ref[...]                           # (TB, H) f32 carried cell state

        h_steps = []
        # Static Python unroll: TT is small and the per-step h slices must stay
        # live for the single lane-dense store below anyway.
        for k in range(TT):
            gates = jnp.dot(h, whh, preferred_element_type=jnp.float32)
            gates = gates + xg_ref[k].astype(jnp.float32)       # bf16 staged xg
            s = jax.nn.sigmoid(gates)             # one lane-dense EUP pass (all 4 gates)
            i_g = s[:, 0 * H:1 * H]
            f_g = s[:, 1 * H:2 * H]
            g_g = 2.0 * s[:, 2 * H:3 * H] - 1.0   # tanh(x) = 2*sigmoid(2x) - 1
            o_g = s[:, 3 * H:4 * H]
            c_new = f_g * c + i_g * g_g
            h_new = (o_g * jnp.tanh(c_new)).astype(whh.dtype)   # single cast per step
            if mask_tail:                         # static branch: only if T % TT != 0
                valid = (c_idx * TT + k) < seq_len
                h_new = jnp.where(valid, h_new, h)
                c_new = jnp.where(valid, c_new, c)
            h_steps.append(h_new)
            h, c = h_new, c_new

        # One lane-dense (TB, TT*H) store per chunk (no lane-sparse per-step vst).
        h_out_ref[...] = jnp.concatenate(h_steps, axis=1)
        hn_ref[...] = h.astype(jnp.float32)
        cn_ref[...] = c

    return kernel


def png_lstm_forward(x, params, *, chunk_timesteps=16, matmul_dtype=jnp.bfloat16):
    """x: (B, T, input_size) f32. Returns (out, (hn, cn)) like nn.LSTM + Linear."""
    w_ih, w_hh, b_ih, b_hh, w_fc, b_fc = (
        params["w_ih"], params["w_hh"], params["b_ih"],
        params["b_hh"], params["w_fc"], params["b_fc"])
    B, T, I = x.shape
    H = w_hh.shape[1]
    md = matmul_dtype

    # ---- choose timesteps-per-chunk: prefer a divisor of T (no tail mask) ----
    tt_req = max(1, min(chunk_timesteps, T))
    TT = max(d for d in range(1, tt_req + 1) if T % d == 0)
    if TT < max(1, tt_req // 4):        # no useful divisor: pad T, mask the tail
        TT = tt_req
    mask_tail = (T % TT) != 0
    T_pad = _round_up(T, TT)
    n_chunks = T_pad // TT

    # ---- batch padding / tiling (parallel axis -> v7x's second TensorCore) ---
    B_pad = _round_up(max(B, 8), 8)               # at least one f32 sublane tile
    TB = B_pad // 2 if (B_pad % 16 == 0) else B_pad
    n_btiles = B_pad // TB

    # ---- fold the 2x of tanh(x)=2*sigmoid(2x)-1 into the g-gate columns ------
    gate_scale = jnp.concatenate([jnp.ones((2 * H,), jnp.float32),
                                  jnp.full((H,), 2.0, jnp.float32),
                                  jnp.ones((H,), jnp.float32)])

    # ---- hoisted input projection: pad the SMALL input, one big matmul -------
    x_tm = jnp.transpose(x, (1, 0, 2))                                 # (T, B, I)
    x_tm = jnp.pad(x_tm, ((0, T_pad - T), (0, B_pad - B), (0, 0)))     # (T_pad, B_pad, I)
    bias = (b_ih + b_hh).astype(jnp.float32)
    xg = jnp.einsum("tbi,gi->tbg", x_tm.astype(md), w_ih.astype(md),
                    preferred_element_type=jnp.float32)
    xg = ((xg + bias) * gate_scale).astype(md)      # bf16 staged, g slice pre-scaled

    whh_t = (w_hh.T.astype(jnp.float32) * gate_scale[None, :]).astype(md)   # (H, 4H)

    kernel = _make_lstm_kernel(T, TT, H, mask_tail)

    # ---- VMEM budget, capped to the chip's physical VMEM ---------------------
    itemsize = jnp.dtype(md).itemsize
    need = (2 * TT * TB * 4 * H * itemsize          # xg chunk (bf16), double-buffered
            + 2 * TB * TT * H * itemsize            # h_out chunk, double-buffered
            + H * 4 * H * itemsize                  # W_hh^T, single-buffered
            + 2 * 2 * TB * H * 4                    # hn / cn resident state
            + (2 << 20))                            # headroom
    vmem_bytes = min(max(need, 4 << 20), int(_vmem_cap_bytes() * 0.8))

    h_all, hn, cn = pl.pallas_call(
        kernel,
        out_shape=(
            jax.ShapeDtypeStruct((B_pad, T_pad * H), md),              # lane-dense h
            jax.ShapeDtypeStruct((B_pad, H), jnp.float32),             # hn
            jax.ShapeDtypeStruct((B_pad, H), jnp.float32),             # cn
        ),
        grid_spec=pltpu.PrefetchScalarGridSpec(
            num_scalar_prefetch=0,
            grid=(n_btiles, n_chunks),
            in_specs=[
                pl.BlockSpec((TT, TB, 4 * H), lambda b, c: (c, b, 0)),  # gates chunk
                pl.BlockSpec((H, 4 * H), lambda b, c: (0, 0),
                             pipeline_mode=pl.Buffered(1)),             # W_hh^T resident
            ],
            out_specs=[
                pl.BlockSpec((TB, TT * H), lambda b, c: (b, c)),        # h chunk
                pl.BlockSpec((TB, H), lambda b, c: (b, 0)),             # hn (state)
                pl.BlockSpec((TB, H), lambda b, c: (b, 0)),             # cn (state)
            ],
        ),
        compiler_params=pltpu.CompilerParams(
            dimension_semantics=("parallel", "arbitrary"),  # batch parallel, time serial
            vmem_limit_bytes=vmem_bytes),
    )(xg, whh_t)

    # ---- hoisted fc head: free reshape (contiguous), batch-major matmul ------
    h_bt = h_all.reshape(B_pad, T_pad, H)[:B, :T]                      # (B, T, H) bf16
    out = jnp.einsum("bth,ah->bta", h_bt, w_fc.astype(md),
                     preferred_element_type=jnp.float32) + b_fc.astype(jnp.float32)

    return out, (hn[:B][None], cn[:B][None])        # hn/cn: (num_layers=1, B, H)


def _reference_forward(x, params, matmul_dtype=jnp.bfloat16):
    """Pure-JAX reference (nn.LSTM + Linear) with the kernel's precision policy
    (bf16 matmul operands + bf16-staged input projection, f32 gate math/cell)."""
    w_ih, w_hh, b_ih, b_hh, w_fc, b_fc = (
        params["w_ih"], params["w_hh"], params["b_ih"],
        params["b_hh"], params["w_fc"], params["b_fc"])
    B, T, I = x.shape
    H = w_hh.shape[1]
    md = matmul_dtype

    bias = (b_ih + b_hh).astype(jnp.float32)
    xg = jnp.einsum("tbi,gi->tbg", jnp.transpose(x, (1, 0, 2)).astype(md),
                    w_ih.astype(md), preferred_element_type=jnp.float32)
    xg = (xg + bias).astype(md)                      # same bf16 staging (unscaled)
    whh_t = w_hh.T.astype(md)

    def step(carry, xg_t):
        h, c = carry                                 # h bf16, c f32
        gates = (jnp.dot(h, whh_t, preferred_element_type=jnp.float32)
                 + xg_t.astype(jnp.float32))
        i_g = jax.nn.sigmoid(gates[:, 0 * H:1 * H])
        f_g = jax.nn.sigmoid(gates[:, 1 * H:2 * H])
        g_g = jnp.tanh(gates[:, 2 * H:3 * H])
        o_g = jax.nn.sigmoid(gates[:, 3 * H:4 * H])
        c = f_g * c + i_g * g_g
        h = (o_g * jnp.tanh(c)).astype(md)
        return (h, c), h

    h0 = jnp.zeros((B, H), md)
    c0 = jnp.zeros((B, H), jnp.float32)
    (hn, cn), hs = lax.scan(step, (h0, c0), xg)      # hs: (T, B, H) bf16
    out = jnp.einsum("tbh,ah->bta", hs, w_fc.astype(md),
                     preferred_element_type=jnp.float32) + b_fc.astype(jnp.float32)
    return out, (hn.astype(jnp.float32)[None], cn[None])


def init_params(key, input_size, hidden_dim, n_actions):
    """Deterministic init matching nn.LSTM / nn.Linear parameter shapes."""
    ks = jax.random.split(key, 6)
    s = 1.0 / jnp.sqrt(hidden_dim)
    return {
        "w_ih": jax.random.uniform(ks[0], (4 * hidden_dim, input_size), jnp.float32, -s, s),
        "w_hh": jax.random.uniform(ks[1], (4 * hidden_dim, hidden_dim), jnp.float32, -s, s),
        "b_ih": jax.random.uniform(ks[2], (4 * hidden_dim,), jnp.float32, -s, s),
        "b_hh": jax.random.uniform(ks[3], (4 * hidden_dim,), jnp.float32, -s, s),
        "w_fc": jax.random.uniform(ks[4], (n_actions, hidden_dim), jnp.float32, -s, s),
        "b_fc": jax.random.uniform(ks[5], (n_actions,), jnp.float32, -s, s),
    }


if __name__ == "__main__":
    # B=12 -> B_pad=16 -> two parallel batch tiles; chunk_timesteps=4 with T=8
    # -> two sequential time chunks (exercises the resident hn/cn state).
    B, T, I, H, A = 12, 8, 16, 32, 4
    key = jax.random.PRNGKey(0)
    k_x, k_p = jax.random.split(key)
    x = jax.random.normal(k_x, (B, T, I), jnp.float32)
    params = init_params(k_p, I, H, A)

    out, (hn, cn) = png_lstm_forward(x, params, chunk_timesteps=4)
    jax.block_until_ready((out, hn, cn))

    out_ref, (hn_ref, cn_ref) = _reference_forward(x, params)
    assert out.shape == (B, T, A) and hn.shape == (1, B, H) and cn.shape == (1, B, H)
    assert jnp.allclose(out, out_ref, atol=2e-3, rtol=2e-3)
    assert jnp.allclose(hn, hn_ref, atol=2e-3, rtol=2e-3)
    assert jnp.allclose(cn, cn_ref, atol=2e-3, rtol=2e-3)

    print("KERNEL_OK")
</pallas_src>

<mosaic_0001>
module attributes {stable_mosaic.version = 11 : i64} {
  func.func @kernel(%arg0: i32, %arg1: i32, %arg2: memref<4x8x128xbf16, #tpu.memory_space<vmem>>, %arg3: memref<32x128xbf16, #tpu.memory_space<vmem>>, %arg4: memref<8x128xbf16, #tpu.memory_space<vmem>>, %arg5: memref<8x32xf32, #tpu.memory_space<vmem>>, %arg6: memref<8x32xf32, #tpu.memory_space<vmem>>) attributes {dimension_semantics = [#tpu.dimension_semantics<parallel>, #tpu.dimension_semantics<arbitrary>], iteration_bounds = array<i64: 2, 2>, scalar_prefetch = 0 : i64, scratch_operands = 0 : i64, tpu.core_type = #tpu.core_type<tc>, window_params = [{transform_indices = @transform_0, window_bounds = array<i64: 4, 8, 128>}, {pipeline_mode = #tpu.pipeline_mode<synchronous>, transform_indices = @transform_1, window_bounds = array<i64: 32, 128>}, {transform_indices = @transform_2, window_bounds = array<i64: 8, 128>}, {transform_indices = @transform_3, window_bounds = array<i64: 8, 32>}, {transform_indices = @transform_4, window_bounds = array<i64: 8, 32>}]} {
    %c0_i32 = arith.constant 0 : i32
    %0 = arith.cmpi eq, %arg1, %c0_i32 : i32
    %1 = arith.extui %0 : i1 to i32
    %c0_i32_0 = arith.constant 0 : i32
    %2 = arith.cmpi ne, %1, %c0_i32_0 : i32
    scf.if %2 {
      %cst_36 = arith.constant 0.000000e+00 : f32
      %108 = vector.broadcast %cst_36 : f32 to vector<8x32xf32>
      %c0_37 = arith.constant 0 : index
      %c0_38 = arith.constant 0 : index
      %109 = vector.load %arg5[%c0_37, %c0_38] : memref<8x32xf32, #tpu.memory_space<vmem>>, vector<8x32xf32>
      tpu.vector_store %arg5[%c0_37, %c0_38], %108 {strides = array<i32>} : memref<8x32xf32, #tpu.memory_space<vmem>>, vector<8x32xf32>,
      %cst_39 = arith.constant 0.000000e+00 : f32
      %110 = vector.broadcast %cst_39 : f32 to vector<8x32xf32>
      %c0_40 = arith.constant 0 : index
      %c0_41 = arith.constant 0 : index
      %111 = vector.load %arg6[%c0_40, %c0_41] : memref<8x32xf32, #tpu.memory_space<vmem>>, vector<8x32xf32>
      tpu.vector_store %arg6[%c0_40, %c0_41], %110 {strides = array<i32>} : memref<8x32xf32, #tpu.memory_space<vmem>>, vector<8x32xf32>,
    } else {
    }
    %c0 = arith.constant 0 : index
    %c0_1 = arith.constant 0 : index
    %3 = vector.load %arg3[%c0, %c0_1] : memref<32x128xbf16, #tpu.memory_space<vmem>>, vector<32x128xbf16>
    %c0_2 = arith.constant 0 : index
    %c0_3 = arith.constant 0 : index
    %4 = vector.load %arg5[%c0_2, %c0_3] : memref<8x32xf32, #tpu.memory_space<vmem>>, vector<8x32xf32>
    %5 = arith.truncf %4 : vector<8x32xf32> to vector<8x32xbf16>
    %c0_4 = arith.constant 0 : index
    %c0_5 = arith.constant 0 : index
    %6 = vector.load %arg6[%c0_4, %c0_5] : memref<8x32xf32, #tpu.memory_space<vmem>>, vector<8x32xf32>
    %cst = arith.constant dense<0.000000e+00> : vector<8x128xf32>
    %7 = tpu.matmul %5, %3, %cst {dimension_numbers = #tpu.dot_dimension_numbers<[1], [0], [0], [1], [0, 0, 1, 1], [], []>} : vector<8x32xbf16>, vector<32x128xbf16>, vector<8x128xf32> -> vector<8x128xf32>
    %c0_6 = arith.constant 0 : index
    %c0_7 = arith.constant 0 : index
    %c0_8 = arith.constant 0 : index
    %8 = vector.load %arg2[%c0_6, %c0_7, %c0_8] : memref<4x8x128xbf16, #tpu.memory_space<vmem>>, vector<1x8x128xbf16>
    %9 = vector.shape_cast %8 : vector<1x8x128xbf16> to vector<8x128xbf16>
    %10 = arith.extf %9 : vector<8x128xbf16> to vector<8x128xf32>
    %11 = arith.addf %7, %10 : vector<8x128xf32>
    %12 = arith.negf %11 : vector<8x128xf32>
    %13 = math.exp %12 : vector<8x128xf32>
    %cst_9 = arith.constant 1.000000e+00 : f32
    %14 = vector.broadcast %cst_9 : f32 to vector<8x128xf32>
    %15 = arith.addf %14, %13 : vector<8x128xf32>
    %16 = arith.divf %14, %15 : vector<8x128xf32>
    %17 = vector.extract_strided_slice %16 {offsets = [0, 0], sizes = [8, 32], strides = [1, 1]} : vector<8x128xf32> to vector<8x32xf32>
    %18 = vector.extract_strided_slice %16 {offsets = [0, 32], sizes = [8, 32], strides = [1, 1]} : vector<8x128xf32> to vector<8x32xf32>
    %19 = vector.extract_strided_slice %16 {offsets = [0, 64], sizes = [8, 32], strides = [1, 1]} : vector<8x128xf32> to vector<8x32xf32>
    %cst_10 = arith.constant 2.000000e+00 : f32
    %20 = vector.broadcast %cst_10 : f32 to vector<8x32xf32>
    %21 = arith.mulf %20, %19 : vector<8x32xf32>
    %cst_11 = arith.constant 1.000000e+00 : f32
    %22 = vector.broadcast %cst_11 : f32 to vector<8x32xf32>
    %23 = arith.subf %21, %22 : vector<8x32xf32>
    %24 = vector.extract_strided_slice %16 {offsets = [0, 96], sizes = [8, 32], strides = [1, 1]} : vector<8x128xf32> to vector<8x32xf32>
    %25 = arith.mulf %18, %6 : vector<8x32xf32>
    %26 = arith.mulf %17, %23 : vector<8x32xf32>
    %27 = arith.addf %25, %26 : vector<8x32xf32>
    %28 = math.tanh %27 : vector<8x32xf32>
    %29 = arith.mulf %24, %28 : vector<8x32xf32>
    %30 = arith.truncf %29 : vector<8x32xf32> to vector<8x32xbf16>
    %cst_12 = arith.constant dense<0.000000e+00> : vector<8x128xf32>
    %31 = tpu.matmul %30, %3, %cst_12 {dimension_numbers = #tpu.dot_dimension_numbers<[1], [0], [0], [1], [0, 0, 1, 1], [], []>} : vector<8x32xbf16>, vector<32x128xbf16>, vector<8x128xf32> -> vector<8x128xf32>
    %c1 = arith.constant 1 : index
    %c0_13 = arith.constant 0 : index
    %c0_14 = arith.constant 0 : index
    %32 = vector.load %arg2[%c1, %c0_13, %c0_14] : memref<4x8x128xbf16, #tpu.memory_space<vmem>>, vector<1x8x128xbf16>
    %33 = vector.shape_cast %32 : vector<1x8x128xbf16> to vector<8x128xbf16>
    %34 = arith.extf %33 : vector<8x128xbf16> to vector<8x128xf32>
    %35 = arith.addf %31, %34 : vector<8x128xf32>
    %36 = arith.negf %35 : vector<8x128xf32>
    %37 = math.exp %36 : vector<8x128xf32>
    %cst_15 = arith.constant 1.000000e+00 : f32
    %38 = vector.broadcast %cst_15 : f32 to vector<8x128xf32>
    %39 = arith.addf %38, %37 : vector<8x128xf32>
    %40 = arith.divf %38, %39 : vector<8x128xf32>
    %41 = vector.extract_strided_slice %40 {offsets = [0, 0], sizes = [8, 32], strides = [1, 1]} : vector<8x128xf32> to vector<8x32xf32>
    %42 = vector.extract_strided_slice %40 {offsets = [0, 32], sizes = [8, 32], strides = [1, 1]} : vector<8x128xf32> to vector<8x32xf32>
    %43 = vector.extract_strided_slice %40 {offsets = [0, 64], sizes = [8, 32], strides = [1, 1]} : vector<8x128xf32> to vector<8x32xf32>
    %cst_16 = arith.constant 2.000000e+00 : f32
    %44 = vector.broadcast %cst_16 : f32 to vector<8x32xf32>
    %45 = arith.mulf %44, %43 : vector<8x32xf32>
    %cst_17 = arith.constant 1.000000e+00 : f32
    %46 = vector.broadcast %cst_17 : f32 to vector<8x32xf32>
    %47 = arith.subf %45, %46 : vector<8x32xf32>
    %48 = vector.extract_strided_slice %40 {offsets = [0, 96], sizes = [8, 32], strides = [1, 1]} : vector<8x128xf32> to vector<8x32xf32>
    %49 = arith.mulf %42, %27 : vector<8x32xf32>
    %50 = arith.mulf %41, %47 : vector<8x32xf32>
    %51 = arith.addf %49, %50 : vector<8x32xf32>
    %52 = math.tanh %51 : vector<8x32xf32>
    %53 = arith.mulf %48, %52 : vector<8x32xf32>
    %54 = arith.truncf %53 : vector<8x32xf32> to vector<8x32xbf16>
    %cst_18 = arith.constant dense<0.000000e+00> : vector<8x128xf32>
    %55 = tpu.matmul %54, %3, %cst_18 {dimension_numbers = #tpu.dot_dimension_numbers<[1], [0], [0], [1], [0, 0, 1, 1], [], []>} : vector<8x32xbf16>, vector<32x128xbf16>, vector<8x128xf32> -> vector<8x128xf32>
    %c2 = arith.constant 2 : index
    %c0_19 = arith.constant 0 : index
    %c0_20 = arith.constant 0 : index
    %56 = vector.load %arg2[%c2, %c0_19, %c0_20] : memref<4x8x128xbf16, #tpu.memory_space<vmem>>, vector<1x8x128xbf16>
    %57 = vector.shape_cast %56 : vector<1x8x128xbf16> to vector<8x128xbf16>
    %58 = arith.extf %57 : vector<8x128xbf16> to vector<8x128xf32>
    %59 = arith.addf %55, %58 : vector<8x128xf32>
    %60 = arith.negf %59 : vector<8x128xf32>
    %61 = math.exp %60 : vector<8x128xf32>
    %cst_21 = arith.constant 1.000000e+00 : f32
    %62 = vector.broadcast %cst_21 : f32 to vector<8x128xf32>
    %63 = arith.addf %62, %61 : vector<8x128xf32>
    %64 = arith.divf %62, %63 : vector<8x128xf32>
    %65 = vector.extract_strided_slice %64 {offsets = [0, 0], sizes = [8, 32], strides = [1, 1]} : vector<8x128xf32> to vector<8x32xf32>
    %66 = vector.extract_strided_slice %64 {offsets = [0, 32], sizes = [8, 32], strides = [1, 1]} : vector<8x128xf32> to vector<8x32xf32>
    %67 = vector.extract_strided_slice %64 {offsets = [0, 64], sizes = [8, 32], strides = [1, 1]} : vector<8x128xf32> to vector<8x32xf32>
    %cst_22 = arith.constant 2.000000e+00 : f32
    %68 = vector.broadcast %cst_22 : f32 to vector<8x32xf32>
    %69 = arith.mulf %68, %67 : vector<8x32xf32>
    %cst_23 = arith.constant 1.000000e+00 : f32
    %70 = vector.broadcast %cst_23 : f32 to vector<8x32xf32>
    %71 = arith.subf %69, %70 : vector<8x32xf32>
    %72 = vector.extract_strided_slice %64 {offsets = [0, 96], sizes = [8, 32], strides = [1, 1]} : vector<8x128xf32> to vector<8x32xf32>
    %73 = arith.mulf %66, %51 : vector<8x32xf32>
    %74 = arith.mulf %65, %71 : vector<8x32xf32>
    %75 = arith.addf %73, %74 : vector<8x32xf32>
    %76 = math.tanh %75 : vector<8x32xf32>
    %77 = arith.mulf %72, %76 : vector<8x32xf32>
    %78 = arith.truncf %77 : vector<8x32xf32> to vector<8x32xbf16>
    %cst_24 = arith.constant dense<0.000000e+00> : vector<8x128xf32>
    %79 = tpu.matmul %78, %3, %cst_24 {dimension_numbers = #tpu.dot_dimension_numbers<[1], [0], [0], [1], [0, 0, 1, 1], [], []>} : vector<8x32xbf16>, vector<32x128xbf16>, vector<8x128xf32> -> vector<8x128xf32>
    %c3 = arith.constant 3 : index
    %c0_25 = arith.constant 0 : index
    %c0_26 = arith.constant 0 : index
    %80 = vector.load %arg2[%c3, %c0_25, %c0_26] : memref<4x8x128xbf16, #tpu.memory_space<vmem>>, vector<1x8x128xbf16>
    %81 = vector.shape_cast %80 : vector<1x8x128xbf16> to vector<8x128xbf16>
    %82 = arith.extf %81 : vector<8x128xbf16> to vector<8x128xf32>
    %83 = arith.addf %79, %82 : vector<8x128xf32>
    %84 = arith.negf %83 : vector<8x128xf32>
    %85 = math.exp %84 : vector<8x128xf32>
    %cst_27 = arith.constant 1.000000e+00 : f32
    %86 = vector.broadcast %cst_27 : f32 to vector<8x128xf32>
    %87 = arith.addf %86, %85 : vector<8x128xf32>
    %88 = arith.divf %86, %87 : vector<8x128xf32>
    %89 = vector.extract_strided_slice %88 {offsets = [0, 0], sizes = [8, 32], strides = [1, 1]} : vector<8x128xf32> to vector<8x32xf32>
    %90 = vector.extract_strided_slice %88 {offsets = [0, 32], sizes = [8, 32], strides = [1, 1]} : vector<8x128xf32> to vector<8x32xf32>
    %91 = vector.extract_strided_slice %88 {offsets = [0, 64], sizes = [8, 32], strides = [1, 1]} : vector<8x128xf32> to vector<8x32xf32>
    %cst_28 = arith.constant 2.000000e+00 : f32
    %92 = vector.broadcast %cst_28 : f32 to vector<8x32xf32>
    %93 = arith.mulf %92, %91 : vector<8x32xf32>
    %cst_29 = arith.constant 1.000000e+00 : f32
    %94 = vector.broadcast %cst_29 : f32 to vector<8x32xf32>
    %95 = arith.subf %93, %94 : vector<8x32xf32>
    %96 = vector.extract_strided_slice %88 {offsets = [0, 96], sizes = [8, 32], strides = [1, 1]} : vector<8x128xf32> to vector<8x32xf32>
    %97 = arith.mulf %90, %75 : vector<8x32xf32>
    %98 = arith.mulf %89, %95 : vector<8x32xf32>
    %99 = arith.addf %97, %98 : vector<8x32xf32>
    %100 = math.tanh %99 : vector<8x32xf32>
    %101 = arith.mulf %96, %100 : vector<8x32xf32>
    %102 = arith.truncf %101 : vector<8x32xf32> to vector<8x32xbf16>
    %103 = tpu.concatenate %30, %54, %78, %102 in 1 : vector<8x32xbf16>, vector<8x32xbf16>, vector<8x32xbf16>, vector<8x32xbf16> -> vector<8x128xbf16>
    %c0_30 = arith.constant 0 : index
    %c0_31 = arith.constant 0 : index
    %104 = vector.load %arg4[%c0_30, %c0_31] : memref<8x128xbf16, #tpu.memory_space<vmem>>, vector<8x128xbf16>
    tpu.vector_store %arg4[%c0_30, %c0_31], %103 {strides = array<i32>} : memref<8x128xbf16, #tpu.memory_space<vmem>>, vector<8x128xbf16>,
    %105 = arith.extf %102 : vector<8x32xbf16> to vector<8x32xf32>
    %c0_32 = arith.constant 0 : index
    %c0_33 = arith.constant 0 : index
    %106 = vector.load %arg5[%c0_32, %c0_33] : memref<8x32xf32, #tpu.memory_space<vmem>>, vector<8x32xf32>
    tpu.vector_store %arg5[%c0_32, %c0_33], %105 {strides = array<i32>} : memref<8x32xf32, #tpu.memory_space<vmem>>, vector<8x32xf32>,
    %c0_34 = arith.constant 0 : index
    %c0_35 = arith.constant 0 : index
    %107 = vector.load %arg6[%c0_34, %c0_35] : memref<8x32xf32, #tpu.memory_space<vmem>>, vector<8x32xf32>
    tpu.vector_store %arg6[%c0_34, %c0_35], %99 {strides = array<i32>} : memref<8x32xf32, #tpu.memory_space<vmem>>, vector<8x32xf32>,
    return
  }
  func.func @transform_0(%arg0: i32, %arg1: i32) -> (i32, i32, i32) {
    %c0_i32 = arith.constant 0 : i32
    %c0_i32_0 = arith.constant 0 : i32
    return %arg1, %arg0, %c0_i32 : i32, i32, i32
  }
  func.func @transform_1(%arg0: i32, %arg1: i32) -> (i32, i32) {
    %c0_i32 = arith.constant 0 : i32
    %c0_i32_0 = arith.constant 0 : i32
    %c0_i32_1 = arith.constant 0 : i32
    return %c0_i32, %c0_i32_0 : i32, i32
  }
  func.func @transform_2(%arg0: i32, %arg1: i32) -> (i32, i32) {
    %c0_i32 = arith.constant 0 : i32
    return %arg0, %arg1 : i32, i32
  }
  func.func @transform_3(%arg0: i32, %arg1: i32) -> (i32, i32) {
    %c0_i32 = arith.constant 0 : i32
    %c0_i32_0 = arith.constant 0 : i32
    return %arg0, %c0_i32 : i32, i32
  }
  func.func @transform_4(%arg0: i32, %arg1: i32) -> (i32, i32) {
    %c0_i32 = arith.constant 0 : i32
    %c0_i32_0 = arith.constant 0 : i32
    return %arg0, %c0_i32 : i32, i32
  }
}

</mosaic_0001>

<llo_original>
// kernel: tpu_custom_call.1
$region0: #{tpu_custom_call.1}
  #allocation0 [shape = 'u32[]', space=smem, size = 0x4, offset = 0x4, fixed_abs, tag = 'smem constant byte address 0x4 - core index']
  #allocation1 [shape = 'u32[72,128]{1,0:T(1,128)}', space=vmem, size = 0x9000, scoped, tag = 'internal scratch']
  %s0 = inlined_call_operand.hbm [shape: bf16[8,16,128], index: 0, kind: input, shape index: {}]
  %s1 = inlined_call_operand.hbm [shape: bf16[32,128], index: 1, kind: input, shape index: {}]
  %s2 = inlined_call_operand.hbm [shape: bf16[16,256], index: 2, kind: output, shape index: {0}]
  %s3 = inlined_call_operand.hbm [shape: f32[16,32], index: 3, kind: output, shape index: {1}]
  %s4 = inlined_call_operand.hbm [shape: f32[16,32], index: 4, kind: output, shape index: {2}]
  %5 = xla_tuple %s2, %s3, %s4
  %s6 = sld [smem:[#allocation0]]
  $region69: #{tpu_custom_call.1} parent=0
    _
  %s8 = ssub.s32 1, %s6
  %s9 = scalar_select 0, %s8, %s6
  $region1: #{tpu_custom_call.1} parent=0
    #allocation2 [shape = 'u8[16384]{0}', space=vmem, size = 0x4000, scoped, tag = 'input window, operand 0']
    #allocation3 [shape = 's32[2]{0}', space=sflag, size = 0x8, scoped, tag = 'scoped memory for tpu_custom_call.1']
    #allocation4 [shape = 's32[2]{0}', space=sflag, size = 0x8, scoped, tag = 'scoped memory for tpu_custom_call.1']
    #allocation5 [shape = 'u8[8192]{0}', space=vmem, size = 0x2000, scoped, tag = 'input window, operand 1, single buffered']
    #allocation6 [shape = 's32[1]{0}', space=sflag, size = 0x4, scoped, tag = 'scoped memory for tpu_custom_call.1']
    #allocation7 [shape = 'u8[4096]{0}', space=vmem, size = 0x1000, scoped, tag = 'output window, operand 0']
    #allocation8 [shape = 'u8[8192]{0}', space=vmem, size = 0x2000, scoped, tag = 'output window, operand 1']
    #allocation9 [shape = 's32[2]{0}', space=sflag, size = 0x8, scoped, tag = 'scoped memory for tpu_custom_call.1']
    #allocation10 [shape = 'u8[8192]{0}', space=vmem, size = 0x2000, scoped, tag = 'output window, operand 2']
    %10 = vsyncpa [#allocation3], 0
    %s11 = scalar_lea.sflag [#allocation3], 1
    %12 = vsyncpa %s11, 0
    %13 = vsyncpa [#allocation6], 0
    %14 = vsyncpa [#allocation4], 0
    %s15 = scalar_lea.sflag [#allocation4], 1
    %16 = vsyncpa %s15, 0
    %17 = vsyncpa [#allocation9], 0
    %s18 = scalar_lea.sflag [#allocation9], 1
    %19 = vsyncpa %s18, 0
    loop: start=0, step=1, limit=6
    $region2: #{tpu_custom_call.1} parent=1 // loop_pre_header
      _
    $region3: #{tpu_custom_call.1} parent=1 // loop_header
      %s21 = sphi 0, %s25
      %p22 = scmp.ge.s32.totalorder %s21, 6
      %s28 = sphi 0, %s40
      %s29 = sphi 0, %s36
      %s30 = sphi 0, %s28
      %s31 = sphi 0, %s29
      %s32 = sphi 0, %s30
      %s33 = sphi 0, %s31
      %s45 = sphi 0, %s47
      %s48 = sphi 0, %s45
      %s49 = sphi 0, %s48
      %s65 = sphi 0, %s49
      %s69 = sphi 0, %s69
      %s71 = sphi 0, %s69
      %s72 = sphi 0, %s71
      %s86 = sphi 0, %s72
      %s94 = sphi 0, %s96
      %s97 = sphi 0, %s94
      %s98 = sphi 0, %s97
      %s114 = sphi 0, %s98
      %s120 = sphi 0, %s122
      %s123 = sphi 0, %s120
      %s124 = sphi 0, %s123
      %s140 = sphi 0, %s124
      %s146 = sphi 0, %s148
      %s149 = sphi 0, %s146
      %s150 = sphi 0, %s149
      %s166 = sphi 0, %s150
    $region4: #{tpu_custom_call.1} parent=1 // loop_header_branch
      %24 = sbr.rel (%p22) target = $region8
    $region5: #{tpu_custom_call.1} parent=1 // loop_body
      %s26 = ssub.s32 %s21, 1
      %s27 = ssub.s32 %s21, 2
      %s34 = sadd.s32 1, %s29
      %p35 = scmp.ge.s32.totalorder %s34, 2
      %s36 = scalar_select %p35, 0, %s34
      %s37 = sadd.s32 1, %s28
      %s38 = scalar_select %p35, %s37, %s28
      %p39 = scmp.ge.s32.totalorder %s38, 2
      %s40 = scalar_select %p39, 0, %s38
      %s41 = ssub.s32 %s29, %s36
      %s42 = ssub.s32 %s28, %s40
      %s43 = sor.u32 %s41, %s42
      %p44 = scmp.eq.s32.totalorder %s43, 0
      %s46 = sadd.s32 %s45, 1
      %s47 = scalar_select %p44, %s45, %s46
      %p50 = pneg %p44
      %p51 = scmp.eq.s32.totalorder %s21, 3
      %p52 = por %p50, %p51
      %p53 = scmp.ne.s32.totalorder %s45, %s48
      %p54 = scmp.eq.s32.totalorder %s21, 0
      %p55 = por %p53, %p54
      %p56 = scmp.ne.s32.totalorder %s45, %s48
      %p57 = scmp.eq.s32.totalorder %s26, 3
      %p58 = por %p56, %p57
      %p59 = scmp.ne.s32.totalorder %s48, %s49
      %p60 = scmp.eq.s32.totalorder %s26, 0
      %p61 = por %p59, %p60
      %p62 = scmp.ne.s32.totalorder %s48, %s49
      %p63 = scmp.eq.s32.totalorder %s27, 3
      %p64 = por %p62, %p63
      %p66 = scmp.ne.s32.totalorder %s49, %s65
      %p67 = scmp.eq.s32.totalorder %s27, 0
      %p68 = por %p66, %p67
      %s70 = sadd.s32 %s69, 1
      %p73 = scmp.eq.s32.totalorder %s21, 3
      %p74 = scmp.ne.s32.totalorder %s69, %s71
      %p75 = scmp.eq.s32.totalorder %s21, 0
      %p76 = por %p74, %p75
      %p77 = scmp.ne.s32.totalorder %s69, %s71
      %p78 = scmp.eq.s32.totalorder %s26, 3
      %p79 = por %p77, %p78
      %p80 = scmp.ne.s32.totalorder %s71, %s72
      %p81 = scmp.eq.s32.totalorder %s26, 0
      %p82 = por %p80, %p81
      %p83 = scmp.ne.s32.totalorder %s71, %s72
      %p84 = scmp.eq.s32.totalorder %s27, 3
      %p85 = por %p83, %p84
      %p87 = scmp.ne.s32.totalorder %s72, %s86
      %p88 = scmp.eq.s32.totalorder %s27, 0
      %p89 = por %p87, %p88
      %s90 = ssub.s32 %s28, %s40
      %s91 = ssub.s32 %s29, %s36
      %s92 = sor.u32 %s90, %s91
      %p93 = scmp.eq.s32.totalorder %s92, 0
      %s95 = sadd.s32 %s94, 1
      %s96 = scalar_select %p93, %s94, %s95
      %p99 = pneg %p93
      %p100 = scmp.eq.s32.totalorder %s21, 3
      %p101 = por %p99, %p100
      %p102 = scmp.ne.s32.totalorder %s94, %s97
      %p103 = scmp.eq.s32.totalorder %s21, 0
      %p104 = por %p102, %p103
      %p105 = scmp.ne.s32.totalorder %s94, %s97
      %p106 = scmp.eq.s32.totalorder %s26, 3
      %p107 = por %p105, %p106
      %p108 = scmp.ne.s32.totalorder %s97, %s98
      %p109 = scmp.eq.s32.totalorder %s26, 0
      %p110 = por %p108, %p109
      %p111 = scmp.ne.s32.totalorder %s97, %s98
      %p112 = scmp.eq.s32.totalorder %s27, 3
      %p113 = por %p111, %p112
      %p115 = scmp.ne.s32.totalorder %s98, %s114
      %p116 = scmp.eq.s32.totalorder %s27, 0
      %p117 = por %p115, %p116
      %s118 = ssub.s32 %s28, %s40
      %p119 = scmp.eq.s32.totalorder %s118, 0
      %s121 = sadd.s32 %s120, 1
      %s122 = scalar_select %p119, %s120, %s121
      %p125 = pneg %p119
      %p126 = scmp.eq.s32.totalorder %s21, 3
      %p127 = por %p125, %p126
      %p128 = scmp.ne.s32.totalorder %s120, %s123
      %p129 = scmp.eq.s32.totalorder %s21, 0
      %p130 = por %p128, %p129
      %p131 = scmp.ne.s32.totalorder %s120, %s123
      %p132 = scmp.eq.s32.totalorder %s26, 3
      %p133 = por %p131, %p132
      %p134 = scmp.ne.s32.totalorder %s123, %s124
      %p135 = scmp.eq.s32.totalorder %s26, 0
      %p136 = por %p134, %p135
      %p137 = scmp.ne.s32.totalorder %s123, %s124
      %p138 = scmp.eq.s32.totalorder %s27, 3
      %p139 = por %p137, %p138
      %p141 = scmp.ne.s32.totalorder %s124, %s140
      %p142 = scmp.eq.s32.totalorder %s27, 0
      %p143 = por %p141, %p142
      %s144 = ssub.s32 %s28, %s40
      %p145 = scmp.eq.s32.totalorder %s144, 0
      %s147 = sadd.s32 %s146, 1
      %s148 = scalar_select %p145, %s146, %s147
      %p151 = pneg %p145
      %p152 = scmp.eq.s32.totalorder %s21, 3
      %p153 = por %p151, %p152
      %p154 = scmp.ne.s32.totalorder %s146, %s149
      %p155 = scmp.eq.s32.totalorder %s21, 0
      %p156 = por %p154, %p155
      %p157 = scmp.ne.s32.totalorder %s146, %s149
      %p158 = scmp.eq.s32.totalorder %s26, 3
      %p159 = por %p157, %p158
      %p160 = scmp.ne.s32.totalorder %s149, %s150
      %p161 = scmp.eq.s32.totalorder %s26, 0
      %p162 = por %p160, %p161
      %p163 = scmp.ne.s32.totalorder %s149, %s150
      %p164 = scmp.eq.s32.totalorder %s27, 3
      %p165 = por %p163, %p164
      %p167 = scmp.ne.s32.totalorder %s150, %s166
      %p168 = scmp.eq.s32.totalorder %s27, 0
      %p169 = por %p167, %p168
      %p170 = scmp.le.s32.totalorder 1, %s21
      %p171 = scmp.lt.s32.totalorder %s21, 5
      %p172 = pnand %p170, %p171
      %p173 = pneg %p172
      // Predicated region
      $region9: #{tpu_custom_call.1} parent=5 // pred_check
        _
      $region10: #{tpu_custom_call.1} parent=5 // pred_check_branch
        %175 = sbr.rel (%p172) target = $region12
      $region11: #{tpu_custom_call.1} parent=5 // pred_region
        %s176 = ssub.s32 %s21, 1
        // Predicated region
        $region13: #{tpu_custom_call.1} parent=11 // pred_check
          %p177 = pneg %p82
        $region14: #{tpu_custom_call.1} parent=11 // pred_check_branch
          %179 = sbr.rel (%p177) target = $region16
        $region15: #{tpu_custom_call.1} parent=11 // pred_region
          %181 = vsyncadd [#allocation6], 0
          %s182 = sshll.u32 %s1, 4
          %s183 = int_to_ptr.hbm [resolvable:$true] %s182
          %s184 = sshll.u32 [#allocation5], 4
          %s185 = int_to_ptr.vmem [resolvable:$true] %s184
          %190 = dma.hbm_to_vmem [thread:$0]  %s183, 256, %s185, [#allocation6], 64, 64, 4
        $region16: #{tpu_custom_call.1} parent=11 // pred_fallthru
          _
      $region12: #{tpu_custom_call.1} parent=5 // pred_fallthru
        _
      %p191 = scmp.lt.s32.totalorder %s21, 4
      // Predicated region
      $region17: #{tpu_custom_call.1} parent=5 // pred_check
        %p192 = pneg %p191
      $region18: #{tpu_custom_call.1} parent=5 // pred_check_branch
        %194 = sbr.rel (%p192) target = $region20
      $region19: #{tpu_custom_call.1} parent=5 // pred_region
        // Predicated region
        $region21: #{tpu_custom_call.1} parent=19 // pred_check
          %p195 = pneg %p55
        $region22: #{tpu_custom_call.1} parent=19 // pred_check_branch
          %197 = sbr.rel (%p195) target = $region24
        $region23: #{tpu_custom_call.1} parent=19 // pred_region
          %s198 = sand.u32 %s45, 1
          %s199 = scalar_lea.sflag [#allocation3], %s198
          %s200 = sand.u32 %s45, 1
          %s201 = smul.addr %s200, 16
          %s202 = scalar_lea.vmem [#allocation2], %s201
          %s203 = smul.u32 4, %s29
          %205 = vsyncadd %s199, 0
          %s206 = smul.addr %s203, 2
          %s207 = sadd.s32 %s28, %s206
          %s208 = smul.addr %s207, 4
          %s209 = scalar_lea.hbm %s0, %s208
          %s210 = sshll.u32 %s209, 4
          %s211 = int_to_ptr.hbm [resolvable:$true] %s210
          %s212 = sshll.u32 %s202, 4
          %s213 = int_to_ptr.vmem [resolvable:$true] %s212
          %218 = dma.hbm_to_vmem [thread:$0]  %s211, 256, %s213, %s199, 128, 64, 4
        $region24: #{tpu_custom_call.1} parent=19 // pred_fallthru
          _
      $region20: #{tpu_custom_call.1} parent=5 // pred_fallthru
        _
      %p219 = scmp.le.s32.totalorder 1, %s21
      %p220 = scmp.lt.s32.totalorder %s21, 5
      %p221 = pnand %p219, %p220
      %p222 = pneg %p221
      // Predicated region
      $region25: #{tpu_custom_call.1} parent=5 // pred_check
        _
      $region26: #{tpu_custom_call.1} parent=5 // pred_check_branch
        %224 = sbr.rel (%p221) target = $region28
      $region27: #{tpu_custom_call.1} parent=5 // pred_region
        %s225 = ssub.s32 %s21, 1
        %s226 = sand.u32 %s48, 1
        %s227 = scalar_lea.sflag [#allocation3], %s226
        %s228 = sand.u32 %s48, 1
        %s229 = smul.addr %s228, 16
        %s230 = scalar_lea.vmem [#allocation2], %s229
        // Predicated region
        $region29: #{tpu_custom_call.1} parent=27 // pred_check
          %p231 = pneg %p61
        $region30: #{tpu_custom_call.1} parent=27 // pred_check_branch
          %233 = sbr.rel (%p231) target = $region32
        $region31: #{tpu_custom_call.1} parent=27 // pred_region
          %235 = dma.done %s227, 256
        $region32: #{tpu_custom_call.1} parent=27 // pred_fallthru
          _
        // Predicated region
        $region33: #{tpu_custom_call.1} parent=27 // pred_check
          %p236 = pneg %p82
        $region34: #{tpu_custom_call.1} parent=27 // pred_check_branch
          %238 = sbr.rel (%p236) target = $region36
        $region35: #{tpu_custom_call.1} parent=27 // pred_region
          %240 = dma.done [#allocation6], 256
        $region36: #{tpu_custom_call.1} parent=27 // pred_fallthru
          _
        %s241 = sand.u32 %s48, 1
        %s242 = scalar_lea.sflag [#allocation3], %s241
        %s243 = sand.u32 %s48, 1
        %s244 = smul.addr %s243, 16
        %s245 = scalar_lea.vmem [#allocation2], %s244
        %p246 = pneg %p61
        %p247 = pneg %p58
        %p248 = pneg %p82
        %p249 = pneg %p79
        %p250 = pneg %p110
        %p251 = pneg %p107
        %s252 = sand.u32 %s97, 1
        %s253 = scalar_lea.sflag [#allocation4], %s252
        %s254 = sand.u32 %s97, 1
        %s255 = smul.addr %s254, 4
        %s256 = scalar_lea.vmem [#allocation7], %s255
        %p257 = pneg %p136
        %p258 = pneg %p133
        %s259 = sand.u32 %s26, 1
        %s260 = scalar_lea.sflag [#allocation9], %s259
        %s261 = sand.u32 %s123, 1
        %s262 = smul.addr %s261, 8
        %s263 = scalar_lea.vmem [#allocation8], %s262
        %p264 = pneg %p162
        %p265 = pneg %p159
        %s266 = sand.u32 %s26, 1
        %s267 = scalar_lea.sflag [#allocation9], %s266
        %s268 = sand.u32 %s149, 1
        %s269 = smul.addr %s268, 8
        %s270 = scalar_lea.vmem [#allocation10], %s269
        %s271 = smul.u32 4, %s31
        %p273 = scmp.eq.s32.totalorder %s31, 0
        // Predicated region
        $region37: #{tpu_custom_call.1} parent=27 // pred_check
          %p274 = pneg %p273
        $region38: #{tpu_custom_call.1} parent=27 // pred_check_branch
          %276 = sbr.rel (%p274) target = $region40
        $region39: #{tpu_custom_call.1} parent=27 // pred_region
          %vm277 = vcmask 261120
          %278 = vst.msk [vmem:[%s263] sm:$0xff] %vm277, 0.0
          %279 = vst.msk [vmem:[%s270] sm:$0xff] %vm277, 0.0
        $region40: #{tpu_custom_call.1} parent=27 // pred_fallthru
          _
        %v280 = vld [vmem:[#allocation5] sm:$0xf]
        %v281 = vld [vmem:[#allocation5 + $0x4] sm:$0xf]
        %v282 = vld [vmem:[#allocation5 + $0x8] sm:$0xf]
        %v283 = vld [vmem:[#allocation5 + $0xc] sm:$0xf]
        %v284 = vld [vmem:[%s263] sm:$0xff]
        %v285 = vpack.c.bf16 %v284, %v284
        %v286 = vld [vmem:[%s270] sm:$0xff]
        %v287 = vld [vmem:[%s230] sm:$0xf]
        %v288 = vunpack.c.l.bf16 %v287
        %v293 = vunpack.c.l.b16 %v280
        %v294 = vunpack.c.l.b16 %v281
        %v295 = vunpack.c.l.b16 %v282
        %v296 = vunpack.c.l.b16 %v283
        %v297 = vpack.c.b16 %v294, %v293
        %v298 = vpack.c.b16 %v296, %v295
        %vm301 = vcmask 261120
        %v303 = vsel %vm301, %v285, 0
        %305 = vmatpush.bf16.msra.mxu0 0
        %306 = vmatpush.bf16.msra.mxu0 0
        %307 = vmatpush.bf16.msra.mxu0 0
        %308 = vmatpush.bf16.msra.mxu0 0
        %309 = vmatpush.bf16.msra.mxu0 0
        %310 = vmatpush.bf16.msra.mxu0 0
        %311 = vmatpush.bf16.msra.mxu0 %v298
        %312 = vmatpush.bf16.msra.mxu0 %v297
        %313 = vmatmul.bf16.gmra.mxu0 %v303
        %v314 = vpop.f32.mrf.mxu0
        %v315 = vadd.f32 %v288, %v314
        %v316 = vpop.f32.mrf.mxu0
        %317 = vdwg.mxu0
        %v318 = vxor.u32 %v315, 2147483648
        %v319 = vmul.f32 %v318, 1.442695
        %v320 = vpow.pop %v319
        %v321 = vadd.f32 %v320, 1.0
        %v322 = vrcp.pop %v321
        %v323 = vmul.f32 %v321, %v322
        %v324 = vsub.f32 1.0, %v323
        %v325 = vmul.f32 %v322, %v324
        %v326 = vadd.f32 %v322, %v325
        %vm327 = vweird.f32 %v321
        %vm328 = vweird.f32 %v322
        %vm329 = vmor %vm327, %vm328
        %v330 = vsel %vm329, %v322, %v326
        %v331 = vand.u32 2147483647, %v321
        %vm332 = vcmp.eq.f32.partialorder %v331, 8.507059e+37
        %v333 = vand.u32 %v321, 2147483648
        %v334 = vor.u32 1.1754944e-38, %v333
        %v335 = vsel %vm332, %v334, %v330
        %v336 = vmul.f32 1.0, %v335
        %v337 = vmul.f32 %v336, 2.0
        %v338 = vsub.f32 %v337, 1.0
        %340 = vrot.lane.b32.xlu0 %v286, 32
        %v341 = vpop.permute.xlu0 %340
        %v343 = vmul.f32 %v336, %v341
        %345 = vrot.lane.b32.xlu0 %v338, 64
        %v346 = vpop.permute.xlu0 %345
        %v348 = vmul.f32 %v336, %v346
        %350 = vrot.lane.b32.xlu0 %v348, 32
        %v351 = vpop.permute.xlu0 %350
        %v353 = vadd.f32 %v343, %v351
        %v354 = vtanh.pop %v353
        %356 = vrot.lane.b32.xlu0 %v354, 64
        %v357 = vpop.permute.xlu0 %356
        %v359 = vmul.f32 %v336, %v357
        %v360 = vpack.c.bf16 %v359, %v359
        %s361 = scalar_lea.vmem %s230, 4 [#allocation2]
        %v362 = vld [vmem:[%s361] sm:$0xf]
        %v363 = vunpack.c.l.bf16 %v362
        %v365 = vunpack.c.l.b16 %v360
        %v366 = vpack.c.b16 %v365, %v365
        %367 = vrot.lane.b32.xlu0 %v366, 32
        %v368 = vpop.permute.xlu0 %367
        %v370 = vsel %vm301, %v368, 0
        %372 = vmatpush.bf16.msra.mxu0 0
        %373 = vmatpush.bf16.msra.mxu0 0
        %374 = vmatpush.bf16.msra.mxu0 0
        %375 = vmatpush.bf16.msra.mxu0 0
        %376 = vmatpush.bf16.msra.mxu0 0
        %377 = vmatpush.bf16.msra.mxu0 0
        %378 = vmatpush.bf16.msra.mxu0 %v298
        %379 = vmatpush.bf16.msra.mxu0 %v297
        %380 = vmatmul.bf16.gmra.mxu0 %v370
        %v381 = vpop.f32.mrf.mxu0
        %v382 = vadd.f32 %v363, %v381
        %v383 = vpop.f32.mrf.mxu0
        %384 = vdwg.mxu0
        %v385 = vxor.u32 %v382, 2147483648
        %v386 = vmul.f32 %v385, 1.442695
        %v387 = vpow.pop %v386
        %v388 = vadd.f32 %v387, 1.0
        %v389 = vrcp.pop %v388
        %v390 = vmul.f32 %v388, %v389
        %v391 = vsub.f32 1.0, %v390
        %v392 = vmul.f32 %v389, %v391
        %v393 = vadd.f32 %v389, %v392
        %vm394 = vweird.f32 %v388
        %vm395 = vweird.f32 %v389
        %vm396 = vmor %vm394, %vm395
        %v397 = vsel %vm396, %v389, %v393
        %v398 = vand.u32 2147483647, %v388
        %vm399 = vcmp.eq.f32.partialorder %v398, 8.507059e+37
        %v400 = vand.u32 %v388, 2147483648
        %v401 = vor.u32 1.1754944e-38, %v400
        %v402 = vsel %vm399, %v401, %v397
        %v403 = vmul.f32 1.0, %v402
        %v404 = vmul.f32 %v403, 2.0
        %v405 = vsub.f32 %v404, 1.0
        %v406 = vmul.f32 %v403, %v353
        %408 = vrot.lane.b32.xlu0 %v405, 64
        %v409 = vpop.permute.xlu0 %408
        %v411 = vmul.f32 %v403, %v409
        %413 = vrot.lane.b32.xlu0 %v411, 32
        %v414 = vpop.permute.xlu0 %413
        %v416 = vadd.f32 %v406, %v414
        %v417 = vtanh.pop %v416
        %419 = vrot.lane.b32.xlu0 %v417, 64
        %v420 = vpop.permute.xlu0 %419
        %v422 = vmul.f32 %v403, %v420
        %v423 = vpack.c.bf16 %v422, %v422
        %s424 = scalar_lea.vmem %s230, 8 [#allocation2]
        %v425 = vld [vmem:[%s424] sm:$0xf]
        %v426 = vunpack.c.l.bf16 %v425
        %v428 = vunpack.c.l.b16 %v423
        %v429 = vpack.c.b16 %v428, %v428
        %430 = vrot.lane.b32.xlu0 %v429, 32
        %v431 = vpop.permute.xlu0 %430
        %v433 = vsel %vm301, %v431, 0
        %435 = vmatpush.bf16.msra.mxu0 0
        %436 = vmatpush.bf16.msra.mxu0 0
        %437 = vmatpush.bf16.msra.mxu0 0
        %438 = vmatpush.bf16.msra.mxu0 0
        %439 = vmatpush.bf16.msra.mxu0 0
        %440 = vmatpush.bf16.msra.mxu0 0
        %441 = vmatpush.bf16.msra.mxu0 %v298
        %442 = vmatpush.bf16.msra.mxu0 %v297
        %443 = vmatmul.bf16.gmra.mxu0 %v433
        %v444 = vpop.f32.mrf.mxu0
        %v445 = vadd.f32 %v426, %v444
        %v446 = vpop.f32.mrf.mxu0
        %447 = vdwg.mxu0
        %v448 = vxor.u32 %v445, 2147483648
        %v449 = vmul.f32 %v448, 1.442695
        %v450 = vpow.pop %v449
        %v451 = vadd.f32 %v450, 1.0
        %v452 = vrcp.pop %v451
        %v453 = vmul.f32 %v451, %v452
        %v454 = vsub.f32 1.0, %v453
        %v455 = vmul.f32 %v452, %v454
        %v456 = vadd.f32 %v452, %v455
        %vm457 = vweird.f32 %v451
        %vm458 = vweird.f32 %v452
        %vm459 = vmor %vm457, %vm458
        %v460 = vsel %vm459, %v452, %v456
        %v461 = vand.u32 2147483647, %v451
        %vm462 = vcmp.eq.f32.partialorder %v461, 8.507059e+37
        %v463 = vand.u32 %v451, 2147483648
        %v464 = vor.u32 1.1754944e-38, %v463
        %v465 = vsel %vm462, %v464, %v460
        %v466 = vmul.f32 1.0, %v465
        %v467 = vmul.f32 %v466, 2.0
        %v468 = vsub.f32 %v467, 1.0
        %v469 = vmul.f32 %v466, %v416
        %471 = vrot.lane.b32.xlu0 %v468, 64
        %v472 = vpop.permute.xlu0 %471
        %v474 = vmul.f32 %v466, %v472
        %476 = vrot.lane.b32.xlu0 %v474, 32
        %v477 = vpop.permute.xlu0 %476
        %v479 = vadd.f32 %v469, %v477
        %v480 = vtanh.pop %v479
        %482 = vrot.lane.b32.xlu0 %v480, 64
        %v483 = vpop.permute.xlu0 %482
        %v485 = vmul.f32 %v466, %v483
        %v486 = vpack.c.bf16 %v485, %v485
        %s487 = scalar_lea.vmem %s230, 12 [#allocation2]
        %v488 = vld [vmem:[%s487] sm:$0xf]
        %v489 = vunpack.c.l.bf16 %v488
        %v491 = vunpack.c.l.b16 %v486
        %v492 = vpack.c.b16 %v491, %v491
        %493 = vrot.lane.b32.xlu0 %v492, 32
        %v494 = vpop.permute.xlu0 %493
        %v496 = vsel %vm301, %v494, 0
        %498 = vmatpush.bf16.msra.mxu0 0
        %499 = vmatpush.bf16.msra.mxu0 0
        %500 = vmatpush.bf16.msra.mxu0 0
        %501 = vmatpush.bf16.msra.mxu0 0
        %502 = vmatpush.bf16.msra.mxu0 0
        %503 = vmatpush.bf16.msra.mxu0 0
        %504 = vmatpush.bf16.msra.mxu0 %v298
        %505 = vmatpush.bf16.msra.mxu0 %v297
        %506 = vmatmul.bf16.gmra.mxu0 %v496
        %v507 = vpop.f32.mrf.mxu0
        %v508 = vadd.f32 %v489, %v507
        %v509 = vpop.f32.mrf.mxu0
        %510 = vdwg.mxu0
        %v511 = vxor.u32 %v508, 2147483648
        %v512 = vmul.f32 %v511, 1.442695
        %v513 = vpow.pop %v512
        %v514 = vadd.f32 %v513, 1.0
        %v515 = vrcp.pop %v514
        %v516 = vmul.f32 %v514, %v515
        %v517 = vsub.f32 1.0, %v516
        %v518 = vmul.f32 %v515, %v517
        %v519 = vadd.f32 %v515, %v518
        %vm520 = vweird.f32 %v514
        %vm521 = vweird.f32 %v515
        %vm522 = vmor %vm520, %vm521
        %v523 = vsel %vm522, %v515, %v519
        %v524 = vand.u32 2147483647, %v514
        %vm525 = vcmp.eq.f32.partialorder %v524, 8.507059e+37
        %v526 = vand.u32 %v514, 2147483648
        %v527 = vor.u32 1.1754944e-38, %v526
        %v528 = vsel %vm525, %v527, %v523
        %v529 = vmul.f32 1.0, %v528
        %v530 = vmul.f32 %v529, 2.0
        %v531 = vsub.f32 %v530, 1.0
        %v532 = vmul.f32 %v529, %v479
        %534 = vrot.lane.b32.xlu0 %v531, 64
        %v535 = vpop.permute.xlu0 %534
        %v537 = vmul.f32 %v529, %v535
        %539 = vrot.lane.b32.xlu0 %v537, 32
        %v540 = vpop.permute.xlu0 %539
        %v542 = vadd.f32 %v532, %v540
        %v543 = vtanh.pop %v542
        %545 = vrot.lane.b32.xlu0 %v543, 64
        %v546 = vpop.permute.xlu0 %545
        %v548 = vmul.f32 %v529, %v546
        %v549 = vpack.c.bf16 %v548, %v548
        %550 = vrot.lane.b32.xlu0 %v429, 64
        %v551 = vpop.permute.xlu0 %550
        %552 = vrot.lane.b32.xlu0 %v492, 96
        %v553 = vpop.permute.xlu0 %552
        %v555 = vsel %vm301, %v368, %v551
        %vm556 = vcmask 523264
        %v558 = vsel %vm556, %v555, %v553
        %vm559 = vcmask 785408
        %v561 = vsel %vm559, %v558, %v549
        %563 = vst [vmem:[%s256] sm:$0xf] %v561
        %v564 = vunpack.c.l.bf16 %v549
        %566 = vrot.lane.b32.xlu0 %v564, 32
        %v567 = vpop.permute.xlu0 %566
        %569 = vst.msk [vmem:[%s263] sm:$0xff] %vm301, %v567
        %571 = vrot.lane.b32.xlu0 %v542, 96
        %v572 = vpop.permute.xlu0 %571
        %574 = vst.msk [vmem:[%s270] sm:$0xff] %vm301, %v572
        %s575 = sand.u32 %s97, 1
        %s576 = scalar_lea.sflag [#allocation4], %s575
        %s577 = sand.u32 %s97, 1
        %s578 = smul.addr %s577, 4
        %s579 = scalar_lea.vmem [#allocation7], %s578
        %s580 = sand.u32 %s26, 1
        %s581 = scalar_lea.sflag [#allocation9], %s580
        %s582 = sand.u32 %s123, 1
        %s583 = smul.addr %s582, 8
        %s584 = scalar_lea.vmem [#allocation8], %s583
        %s585 = sand.u32 %s26, 1
        %s586 = scalar_lea.sflag [#allocation9], %s585
        %s587 = sand.u32 %s149, 1
        %s588 = smul.addr %s587, 8
        %s589 = scalar_lea.vmem [#allocation10], %s588
        // Predicated region
        $region41: #{tpu_custom_call.1} parent=27 // pred_check
          %p590 = pneg %p107
        $region42: #{tpu_custom_call.1} parent=27 // pred_check_branch
          %592 = sbr.rel (%p590) target = $region44
        $region43: #{tpu_custom_call.1} parent=27 // pred_region
          %594 = vsyncadd %s576, 0
          %s595 = smul.addr %s30, 2
          %s596 = sadd.s32 %s31, %s595
          %s597 = smul.addr %s596, 4
          %s598 = scalar_lea.hbm %s2, %s597
          %s600 = sshll.u32 %s579, 4
          %s601 = int_to_ptr.vmem [resolvable:$true] %s600
          %s602 = sshll.u32 %s598, 4
          %s603 = int_to_ptr.hbm [resolvable:$true] %s602
          %605 = dma.vmem_to_hbm [thread:$0]  %s601, 64, %s603, %s576
        $region44: #{tpu_custom_call.1} parent=27 // pred_fallthru
          _
        // Predicated region
        $region45: #{tpu_custom_call.1} parent=27 // pred_check
          %p606 = pneg %p133
        $region46: #{tpu_custom_call.1} parent=27 // pred_check_branch
          %608 = sbr.rel (%p606) target = $region48
        $region47: #{tpu_custom_call.1} parent=27 // pred_region
          %610 = vsyncadd %s581, 0
          %s611 = smul.addr %s30, 8
          %s612 = scalar_lea.hbm %s3, %s611
          %s614 = sshll.u32 %s584, 4
          %s615 = int_to_ptr.vmem [resolvable:$true] %s614
          %s616 = sshll.u32 %s612, 4
          %s617 = int_to_ptr.hbm [resolvable:$true] %s616
          %619 = dma.vmem_to_hbm [thread:$0]  %s615, 128, %s617, %s581
        $region48: #{tpu_custom_call.1} parent=27 // pred_fallthru
          _
        // Predicated region
        $region49: #{tpu_custom_call.1} parent=27 // pred_check
          %p620 = pneg %p159
        $region50: #{tpu_custom_call.1} parent=27 // pred_check_branch
          %622 = sbr.rel (%p620) target = $region52
        $region51: #{tpu_custom_call.1} parent=27 // pred_region
          %624 = vsyncadd %s586, 0
          %s625 = smul.addr %s30, 8
          %s626 = scalar_lea.hbm %s4, %s625
          %s628 = sshll.u32 %s589, 4
          %s629 = int_to_ptr.vmem [resolvable:$true] %s628
          %s630 = sshll.u32 %s626, 4
          %s631 = int_to_ptr.hbm [resolvable:$true] %s630
          %633 = dma.vmem_to_hbm [thread:$0]  %s629, 128, %s631, %s586
        $region52: #{tpu_custom_call.1} parent=27 // pred_fallthru
          _
      $region28: #{tpu_custom_call.1} parent=5 // pred_fallthru
        _
      %p634 = scmp.le.s32.totalorder 2, %s21
      // Predicated region
      $region53: #{tpu_custom_call.1} parent=5 // pred_check
        %p635 = pneg %p634
      $region54: #{tpu_custom_call.1} parent=5 // pred_check_branch
        %637 = sbr.rel (%p635) target = $region56
      $region55: #{tpu_custom_call.1} parent=5 // pred_region
        %s638 = ssub.s32 %s21, 2
        // Predicated region
        $region57: #{tpu_custom_call.1} parent=55 // pred_check
          %p639 = pneg %p113
        $region58: #{tpu_custom_call.1} parent=55 // pred_check_branch
          %641 = sbr.rel (%p639) target = $region60
        $region59: #{tpu_custom_call.1} parent=55 // pred_region
          %s642 = sand.u32 %s98, 1
          %s643 = scalar_lea.sflag [#allocation4], %s642
          %s644 = sand.u32 %s98, 1
          %s645 = smul.addr %s644, 4
          %s646 = scalar_lea.vmem [#allocation7], %s645
          %648 = dma.done %s643, 64
        $region60: #{tpu_custom_call.1} parent=55 // pred_fallthru
          _
        // Predicated region
        $region61: #{tpu_custom_call.1} parent=55 // pred_check
          %p649 = pneg %p139
        $region62: #{tpu_custom_call.1} parent=55 // pred_check_branch
          %651 = sbr.rel (%p649) target = $region64
        $region63: #{tpu_custom_call.1} parent=55 // pred_region
          %s652 = sand.u32 %s27, 1
          %s653 = scalar_lea.sflag [#allocation9], %s652
          %s654 = sand.u32 %s124, 1
          %s655 = smul.addr %s654, 8
          %s656 = scalar_lea.vmem [#allocation8], %s655
          %658 = dma.done %s653, 128
        $region64: #{tpu_custom_call.1} parent=55 // pred_fallthru
          _
        // Predicated region
        $region65: #{tpu_custom_call.1} parent=55 // pred_check
          %p659 = pneg %p165
        $region66: #{tpu_custom_call.1} parent=55 // pred_check_branch
          %661 = sbr.rel (%p659) target = $region68
        $region67: #{tpu_custom_call.1} parent=55 // pred_region
          %s662 = sand.u32 %s27, 1
          %s663 = scalar_lea.sflag [#allocation9], %s662
          %s664 = sand.u32 %s150, 1
          %s665 = smul.addr %s664, 8
          %s666 = scalar_lea.vmem [#allocation10], %s665
          %668 = dma.done %s663, 128
        $region68: #{tpu_custom_call.1} parent=55 // pred_fallthru
          _
      $region56: #{tpu_custom_call.1} parent=5 // pred_fallthru
        _
    $region6: #{tpu_custom_call.1} parent=1 // loop_footer
      %s25 = sadd.s32 1, %s21
    $region7: #{tpu_custom_call.1} parent=1 // loop_footer_branch
      %20 = sbr.rel target = $region3
    $region8: #{tpu_custom_call.1} parent=1 // loop_exit
      _
    %669 = vsyncpa [#allocation3], 1
    %s670 = scalar_lea.sflag [#allocation3], 1
    %671 = vsyncpa %s670, 1
    %672 = vsyncpa [#allocation6], 1
    %673 = vsyncpa [#allocation4], 1
    %s674 = scalar_lea.sflag [#allocation4], 1
    %675 = vsyncpa %s674, 1
    %676 = vsyncpa [#allocation9], 1
    %s677 = scalar_lea.sflag [#allocation9], 1
    %678 = vsyncpa %s677, 1

</llo_original>
